<compile_context>
chip_gen: v7x
topology: tpu7x:2x2x1
jax: 0.10.0
libtpu: 0.0.40
codegen_flags: <defaults>
</compile_context>

<pallas_src>
import functools

import jax
import jax.numpy as jnp
from jax.experimental import pallas as pl
from jax.experimental.pallas import tpu as pltpu

LANE = 128


def fcn_kernel(x_ref, w0_ref, b0_ref, wh_ref, bh_ref, we_ref, be_ref, o_ref,
               *, n_in, n_out, use_bf16):
    """Feature-major fused MLP.  All activations are (H, tile_b)."""
    # ---- first layer: Linear(N_INPUT -> H) + tanh -------------------------
    if n_in == 1:
        # (H, 1) * (1, tile_b) rank-1 outer product on the VPU (no MXU),
        # bias (H, 1) broadcast across lanes.
        h = jnp.tanh(w0_ref[...] * x_ref[...] + b0_ref[...])
    else:
        h = jnp.tanh(
            jnp.dot(w0_ref[...], x_ref[...], preferred_element_type=jnp.float32)
            + b0_ref[...]
        )

    # ---- hidden layers: (N_LAYERS - 1) x [Linear(H -> H) + tanh] ----------
    # Static unroll (fine for small N_LAYERS; switch to a grid axis if it grows).
    for l in range(wh_ref.shape[0]):
        lhs = wh_ref[l]          # (H, H)
        rhs = h                  # (H, tile_b)
        if use_bf16:             # optional: v6e/v7x only (bf16 VPU/EUP)
            lhs = lhs.astype(jnp.bfloat16)
            rhs = rhs.astype(jnp.bfloat16)
        h = jnp.tanh(
            jnp.dot(lhs, rhs, preferred_element_type=jnp.float32) + bh_ref[l]
        )

    # ---- output layer: Linear(H -> N_OUTPUT), no activation ---------------
    if n_out == 1:
        # (H, 1) weights broadcast over lanes; VPU mul + cross-sublane (XLU)
        # reduce -> lane-dense (1, tile_b) row.  No 128x write amplification.
        o_ref[...] = (
            jnp.sum(h * we_ref[...], axis=0, keepdims=True) + be_ref[...]
        ).astype(o_ref.dtype)
    else:
        # (n_out, H) @ (H, tile_b) -> (n_out, tile_b), lane-dense store.
        o_ref[...] = (
            jnp.dot(we_ref[...], h, preferred_element_type=jnp.float32)
            + be_ref[...]
        ).astype(o_ref.dtype)


def fcn_forward(x, params, *, num_tiles=2, use_bf16=False):
    """x: (B, N_INPUT) float32; params: dict of stacked weights/biases.

    num_tiles=2 gives one big grid step per TensorCore on v7x; on single-TC
    v5e/v6e the second step costs one ~0.35 us grid-step overhead (negligible).
    """
    w0, b0, wh, bh, we, be = (
        params["w0"], params["b0"], params["wh"],
        params["bh"], params["we"], params["be"],
    )
    B, n_in = x.shape
    n_hidden = w0.shape[1]
    n_out = we.shape[1]
    n_hl = wh.shape[0]

    # Batch tile: ceil(B / num_tiles) rounded up to a lane multiple.
    tile_b = pl.cdiv(pl.cdiv(B, num_tiles), LANE) * LANE
    b_pad = num_tiles * tile_b

    # Feature-major inputs: x^T is (n_in, b_pad), lane-dense (batch on lanes).
    x_t = jnp.pad(x.T, ((0, 0), (0, b_pad - B)))

    # Transposed weights for (H, tile_b) activations.
    w0_t = w0.T                            # (H, n_in)
    b0_t = b0.T                            # (H, 1)
    wh_t = jnp.transpose(wh, (0, 2, 1))    # (n_hl, H, H)
    bh_t = jnp.transpose(bh, (0, 2, 1))    # (n_hl, H, 1)
    we_k = we if n_out == 1 else we.T      # (H, 1) VPU path | (n_out, H) MXU path
    be_k = be.T                            # (n_out, 1)

    kernel = functools.partial(
        fcn_kernel, n_in=n_in, n_out=n_out, use_bf16=use_bf16
    )

    out_t = pl.pallas_call(
        kernel,
        out_shape=jax.ShapeDtypeStruct((n_out, b_pad), x.dtype),
        grid_spec=pltpu.PrefetchScalarGridSpec(
            num_scalar_prefetch=0,
            grid=(b_pad // tile_b,),
            in_specs=[
                pl.BlockSpec((n_in, tile_b), lambda i: (0, i)),                 # x^T tile
                pl.BlockSpec((n_hidden, n_in), lambda i: (0, 0)),               # w0^T
                pl.BlockSpec((n_hidden, 1), lambda i: (0, 0)),                  # b0^T
                pl.BlockSpec((n_hl, n_hidden, n_hidden), lambda i: (0, 0, 0)),  # wh^T
                pl.BlockSpec((n_hl, n_hidden, 1), lambda i: (0, 0, 0)),         # bh^T
                pl.BlockSpec(we_k.shape, lambda i: (0, 0)),                     # we
                pl.BlockSpec((n_out, 1), lambda i: (0, 0)),                     # be^T
            ],
            out_specs=pl.BlockSpec((n_out, tile_b), lambda i: (0, i)),
        ),
        compiler_params=pltpu.CompilerParams(
            dimension_semantics=("parallel",),
            vmem_limit_bytes=32 * 1024 * 1024,
        ),
    )(x_t, w0_t, b0_t, wh_t, bh_t, we_k, be_k)

    # (n_out, b_pad) -> (B, n_out)
    return out_t[:, :B].T


def make_params(key, n_input, n_output, n_hidden, n_layers):
    """Deterministic synthetic init (shapes match PyTorch FCN.__init__,
    stored as (fan_in, fan_out), i.e. transpose of nn.Linear.weight)."""
    ks = jax.random.split(key, 6)
    w0 = jax.random.normal(ks[0], (n_input, n_hidden), jnp.float32) * 0.5
    b0 = jax.random.normal(ks[1], (1, n_hidden), jnp.float32) * 0.1
    wh = jax.random.normal(ks[2], (n_layers - 1, n_hidden, n_hidden), jnp.float32) * 0.2
    bh = jax.random.normal(ks[3], (n_layers - 1, 1, n_hidden), jnp.float32) * 0.1
    we = jax.random.normal(ks[4], (n_hidden, n_output), jnp.float32) * 0.5
    be = jax.random.normal(ks[5], (1, n_output), jnp.float32) * 0.1
    return {"w0": w0, "b0": b0, "wh": wh, "bh": bh, "we": we, "be": be}


def fcn_forward_ref(x, p):
    """Pure-JAX reference mirroring the PyTorch forward (full f32 precision)."""
    hp = jax.lax.Precision.HIGHEST
    h = jnp.tanh(jnp.dot(x, p["w0"], precision=hp) + p["b0"])
    for l in range(p["wh"].shape[0]):
        h = jnp.tanh(jnp.dot(h, p["wh"][l], precision=hp) + p["bh"][l])
    return jnp.dot(h, p["we"], precision=hp) + p["be"]


if __name__ == "__main__":
    # PINN-style sizes: 1-D input coordinate, 1-D output, 32 hidden, 3 layers.
    N_INPUT, N_OUTPUT, N_HIDDEN, N_LAYERS = 1, 1, 32, 3
    B = 1024            # collocation points; 2 lane-dense tiles of 512

    key = jax.random.PRNGKey(0)
    pkey, xkey = jax.random.split(key)
    params = make_params(pkey, N_INPUT, N_OUTPUT, N_HIDDEN, N_LAYERS)
    x = jax.random.normal(xkey, (B, N_INPUT), jnp.float32)

    out = fcn_forward(x, params, num_tiles=2, use_bf16=False)
    out = jax.block_until_ready(out)

    ref = fcn_forward_ref(x, params)
    assert out.shape == (B, N_OUTPUT)
    # Kernel uses default MXU f32 precision vs. HIGHEST in the reference;
    # at H=32 the drift is far below this documented tolerance.
    assert jnp.allclose(out, ref, rtol=1e-4, atol=1e-4), float(
        jnp.max(jnp.abs(out - ref))
    )

    print("KERNEL_OK")
</pallas_src>

<mosaic_0001>
module attributes {stable_mosaic.version = 11 : i64} {
  func.func @fcn_kernel(%arg0: i32, %arg1: memref<1x512xf32, #tpu.memory_space<vmem>>, %arg2: memref<32x1xf32, #tpu.memory_space<vmem>>, %arg3: memref<32x1xf32, #tpu.memory_space<vmem>>, %arg4: memref<2x32x32xf32, #tpu.memory_space<vmem>>, %arg5: memref<2x32x1xf32, #tpu.memory_space<vmem>>, %arg6: memref<32x1xf32, #tpu.memory_space<vmem>>, %arg7: memref<1x1xf32, #tpu.memory_space<vmem>>, %arg8: memref<1x512xf32, #tpu.memory_space<vmem>>) attributes {dimension_semantics = [#tpu.dimension_semantics<parallel>], iteration_bounds = array<i64: 2>, scalar_prefetch = 0 : i64, scratch_operands = 0 : i64, tpu.core_type = #tpu.core_type<tc>, window_params = [{transform_indices = @transform_0, window_bounds = array<i64: 1, 512>}, {pipeline_mode = #tpu.pipeline_mode<synchronous>, transform_indices = @transform_1, window_bounds = array<i64: 32, 1>}, {pipeline_mode = #tpu.pipeline_mode<synchronous>, transform_indices = @transform_2, window_bounds = array<i64: 32, 1>}, {pipeline_mode = #tpu.pipeline_mode<synchronous>, transform_indices = @transform_3, window_bounds = array<i64: 2, 32, 32>}, {pipeline_mode = #tpu.pipeline_mode<synchronous>, transform_indices = @transform_4, window_bounds = array<i64: 2, 32, 1>}, {pipeline_mode = #tpu.pipeline_mode<synchronous>, transform_indices = @transform_5, window_bounds = array<i64: 32, 1>}, {pipeline_mode = #tpu.pipeline_mode<synchronous>, transform_indices = @transform_6, window_bounds = array<i64: 1, 1>}, {transform_indices = @transform_7, window_bounds = array<i64: 1, 512>}]} {
    %c0 = arith.constant 0 : index
    %c0_0 = arith.constant 0 : index
    %0 = vector.load %arg2[%c0, %c0_0] : memref<32x1xf32, #tpu.memory_space<vmem>>, vector<32x1xf32>
    %c0_1 = arith.constant 0 : index
    %c0_2 = arith.constant 0 : index
    %1 = vector.load %arg1[%c0_1, %c0_2] : memref<1x512xf32, #tpu.memory_space<vmem>>, vector<1x512xf32>
    %2 = vector.broadcast %0 : vector<32x1xf32> to vector<32x512xf32>
    %3 = vector.broadcast %1 : vector<1x512xf32> to vector<32x512xf32>
    %4 = arith.mulf %2, %3 : vector<32x512xf32>
    %c0_3 = arith.constant 0 : index
    %c0_4 = arith.constant 0 : index
    %5 = vector.load %arg3[%c0_3, %c0_4] : memref<32x1xf32, #tpu.memory_space<vmem>>, vector<32x1xf32>
    %6 = vector.broadcast %5 : vector<32x1xf32> to vector<32x512xf32>
    %7 = arith.addf %4, %6 : vector<32x512xf32>
    %8 = math.tanh %7 : vector<32x512xf32>
    %c0_5 = arith.constant 0 : index
    %c0_6 = arith.constant 0 : index
    %c0_7 = arith.constant 0 : index
    %9 = vector.load %arg4[%c0_5, %c0_6, %c0_7] : memref<2x32x32xf32, #tpu.memory_space<vmem>>, vector<1x32x32xf32>
    %10 = vector.shape_cast %9 : vector<1x32x32xf32> to vector<32x32xf32>
    %cst = arith.constant dense<0.000000e+00> : vector<32x512xf32>
    %11 = tpu.matmul %10, %8, %cst {dimension_numbers = #tpu.dot_dimension_numbers<[1], [0], [0], [1], [0, 0, 1, 1], [], []>} : vector<32x32xf32>, vector<32x512xf32>, vector<32x512xf32> -> vector<32x512xf32>
    %c0_8 = arith.constant 0 : index
    %c0_9 = arith.constant 0 : index
    %c0_10 = arith.constant 0 : index
    %12 = vector.load %arg5[%c0_8, %c0_9, %c0_10] : memref<2x32x1xf32, #tpu.memory_space<vmem>>, vector<1x32x1xf32>
    %13 = vector.shape_cast %12 : vector<1x32x1xf32> to vector<32x1xf32>
    %14 = vector.broadcast %13 : vector<32x1xf32> to vector<32x512xf32>
    %15 = arith.addf %11, %14 : vector<32x512xf32>
    %16 = math.tanh %15 : vector<32x512xf32>
    %c1 = arith.constant 1 : index
    %c0_11 = arith.constant 0 : index
    %c0_12 = arith.constant 0 : index
    %17 = vector.load %arg4[%c1, %c0_11, %c0_12] : memref<2x32x32xf32, #tpu.memory_space<vmem>>, vector<1x32x32xf32>
    %18 = vector.shape_cast %17 : vector<1x32x32xf32> to vector<32x32xf32>
    %cst_13 = arith.constant dense<0.000000e+00> : vector<32x512xf32>
    %19 = tpu.matmul %18, %16, %cst_13 {dimension_numbers = #tpu.dot_dimension_numbers<[1], [0], [0], [1], [0, 0, 1, 1], [], []>} : vector<32x32xf32>, vector<32x512xf32>, vector<32x512xf32> -> vector<32x512xf32>
    %c1_14 = arith.constant 1 : index
    %c0_15 = arith.constant 0 : index
    %c0_16 = arith.constant 0 : index
    %20 = vector.load %arg5[%c1_14, %c0_15, %c0_16] : memref<2x32x1xf32, #tpu.memory_space<vmem>>, vector<1x32x1xf32>
    %21 = vector.shape_cast %20 : vector<1x32x1xf32> to vector<32x1xf32>
    %22 = vector.broadcast %21 : vector<32x1xf32> to vector<32x512xf32>
    %23 = arith.addf %19, %22 : vector<32x512xf32>
    %24 = math.tanh %23 : vector<32x512xf32>
    %c0_17 = arith.constant 0 : index
    %c0_18 = arith.constant 0 : index
    %25 = vector.load %arg6[%c0_17, %c0_18] : memref<32x1xf32, #tpu.memory_space<vmem>>, vector<32x1xf32>
    %26 = vector.broadcast %25 : vector<32x1xf32> to vector<32x512xf32>
    %27 = arith.mulf %24, %26 : vector<32x512xf32>
    %cst_19 = arith.constant dense<0.000000e+00> : vector<512xf32>
    %28 = vector.multi_reduction <add>, %27, %cst_19 [0] : vector<32x512xf32> to vector<512xf32>
    %29 = vector.shape_cast %28 : vector<512xf32> to vector<1x512xf32>
    %c0_20 = arith.constant 0 : index
    %c0_21 = arith.constant 0 : index
    %30 = vector.load %arg7[%c0_20, %c0_21] : memref<1x1xf32, #tpu.memory_space<vmem>>, vector<1x1xf32>
    %31 = vector.broadcast %30 : vector<1x1xf32> to vector<1x512xf32>
    %32 = arith.addf %29, %31 : vector<1x512xf32>
    %c0_22 = arith.constant 0 : index
    %c0_23 = arith.constant 0 : index
    %33 = vector.load %arg8[%c0_22, %c0_23] : memref<1x512xf32, #tpu.memory_space<vmem>>, vector<1x512xf32>
    tpu.vector_store %arg8[%c0_22, %c0_23], %32 {strides = array<i32>} : memref<1x512xf32, #tpu.memory_space<vmem>>, vector<1x512xf32>,
    return
  }
  func.func @transform_0(%arg0: i32) -> (i32, i32) {
    %c0_i32 = arith.constant 0 : i32
    %c0_i32_0 = arith.constant 0 : i32
    return %c0_i32, %arg0 : i32, i32
  }
  func.func @transform_1(%arg0: i32) -> (i32, i32) {
    %c0_i32 = arith.constant 0 : i32
    %c0_i32_0 = arith.constant 0 : i32
    %c0_i32_1 = arith.constant 0 : i32
    return %c0_i32, %c0_i32_0 : i32, i32
  }
  func.func @transform_2(%arg0: i32) -> (i32, i32) {
    %c0_i32 = arith.constant 0 : i32
    %c0_i32_0 = arith.constant 0 : i32
    %c0_i32_1 = arith.constant 0 : i32
    return %c0_i32, %c0_i32_0 : i32, i32
  }
  func.func @transform_3(%arg0: i32) -> (i32, i32, i32) {
    %c0_i32 = arith.constant 0 : i32
    %c0_i32_0 = arith.constant 0 : i32
    %c0_i32_1 = arith.constant 0 : i32
    %c0_i32_2 = arith.constant 0 : i32
    return %c0_i32, %c0_i32_0, %c0_i32_1 : i32, i32, i32
  }
  func.func @transform_4(%arg0: i32) -> (i32, i32, i32) {
    %c0_i32 = arith.constant 0 : i32
    %c0_i32_0 = arith.constant 0 : i32
    %c0_i32_1 = arith.constant 0 : i32
    %c0_i32_2 = arith.constant 0 : i32
    return %c0_i32, %c0_i32_0, %c0_i32_1 : i32, i32, i32
  }
  func.func @transform_5(%arg0: i32) -> (i32, i32) {
    %c0_i32 = arith.constant 0 : i32
    %c0_i32_0 = arith.constant 0 : i32
    %c0_i32_1 = arith.constant 0 : i32
    return %c0_i32, %c0_i32_0 : i32, i32
  }
  func.func @transform_6(%arg0: i32) -> (i32, i32) {
    %c0_i32 = arith.constant 0 : i32
    %c0_i32_0 = arith.constant 0 : i32
    %c0_i32_1 = arith.constant 0 : i32
    return %c0_i32, %c0_i32_0 : i32, i32
  }
  func.func @transform_7(%arg0: i32) -> (i32, i32) {
    %c0_i32 = arith.constant 0 : i32
    %c0_i32_0 = arith.constant 0 : i32
    return %c0_i32, %arg0 : i32, i32
  }
}

</mosaic_0001>

<llo_original>
// kernel: tpu_custom_call.1
$region0: #{tpu_custom_call.1}
  #allocation0 [shape = 'u32[]', space=smem, size = 0x4, offset = 0x4, fixed_abs, tag = 'smem constant byte address 0x4 - core index']
  #allocation1 [shape = 'u32[144,128]{1,0:T(1,128)}', space=vmem, size = 0x12000, scoped, tag = 'internal scratch']
  #allocation2 [shape = 'f32[1,1]{1,0:T(1,128)S(1)}', space=vmem, size = 0x200, scoped, tag = 'scoped memory for tpu_custom_call.1']
  %s0 = inlined_call_operand.vmem [shape: f32[1,1024], index: 0, kind: input, shape index: {}]
  %s1 = inlined_call_operand.vmem [shape: f32[32,1], index: 1, kind: input, shape index: {}]
  %s2 = inlined_call_operand.vmem [shape: f32[32,1], index: 2, kind: input, shape index: {}]
  %s3 = inlined_call_operand.vmem [shape: f32[2,32,32], index: 3, kind: input, shape index: {}]
  %s4 = inlined_call_operand.vmem [shape: f32[2,32,1], index: 4, kind: input, shape index: {}]
  %s5 = inlined_call_operand.vmem [shape: f32[32,1], index: 5, kind: input, shape index: {}]
  %s6 = inlined_call_operand.<no memory space> [shape: f32[1,1], index: 6, kind: input, shape index: {}]
  %s7 = inlined_call_operand.hbm [shape: f32[1,1024], index: 7, kind: output, shape index: {}]
  %s8 = sld [smem:[#allocation0]]
  $region61: #{tpu_custom_call.1} parent=0
    _
  %s10 = ssub.s32 1, %s8
  %s11 = scalar_select 0, %s10, %s8
  %v12 = vstv %s6
  %13 = vst [vmem:[#allocation2] sm:$0x1] %v12
  $region1: #{tpu_custom_call.1} parent=0
    #allocation3 [shape = 'u8[4096]{0}', space=vmem, size = 0x1000, scoped, tag = 'output window, operand 0']
    #allocation4 [shape = 's32[2]{0}', space=sflag, size = 0x8, scoped, tag = 'scoped memory for tpu_custom_call.1']
    %14 = vsyncpa [#allocation4], 0
    %s15 = scalar_lea.sflag [#allocation4], 1
    %16 = vsyncpa %s15, 0
    loop: start=0, step=1, limit=4
    $region2: #{tpu_custom_call.1} parent=1 // loop_pre_header
      _
    $region3: #{tpu_custom_call.1} parent=1 // loop_header
      %s18 = sphi 0, %s22
      %p19 = scmp.ge.s32.totalorder %s18, 4
      %s28 = sphi 0, %s30
      %s31 = sphi 0, %s28
      %s32 = sphi 0, %s31
      %s48 = sphi 0, %s32
      %s52 = sphi 0, %s52
      %s54 = sphi 0, %s52
      %s55 = sphi 0, %s54
      %s69 = sphi 0, %s55
      %s73 = sphi 0, %s73
      %s75 = sphi 0, %s73
      %s76 = sphi 0, %s75
      %s90 = sphi 0, %s76
      %s94 = sphi 0, %s94
      %s96 = sphi 0, %s94
      %s97 = sphi 0, %s96
      %s111 = sphi 0, %s97
      %s115 = sphi 0, %s115
      %s117 = sphi 0, %s115
      %s118 = sphi 0, %s117
      %s132 = sphi 0, %s118
      %s136 = sphi 0, %s136
      %s138 = sphi 0, %s136
      %s139 = sphi 0, %s138
      %s153 = sphi 0, %s139
      %s157 = sphi 0, %s157
      %s159 = sphi 0, %s157
      %s160 = sphi 0, %s159
      %s174 = sphi 0, %s160
      %s180 = sphi 0, %s182
      %s183 = sphi 0, %s180
      %s184 = sphi 0, %s183
      %s200 = sphi 0, %s184
    $region4: #{tpu_custom_call.1} parent=1 // loop_header_branch
      %21 = sbr.rel (%p19) target = $region8
    $region5: #{tpu_custom_call.1} parent=1 // loop_body
      %s23 = ssub.s32 %s18, 1
      %s24 = ssub.s32 %s18, 2
      %s25 = sadd.s32 %s18, 1
      %s26 = ssub.s32 %s18, %s25
      %p27 = scmp.eq.s32.totalorder %s26, 0
      %s29 = sadd.s32 %s28, 1
      %s30 = scalar_select %p27, %s28, %s29
      %p33 = pneg %p27
      %p34 = scmp.eq.s32.totalorder %s18, 1
      %p35 = por %p33, %p34
      %p36 = scmp.ne.s32.totalorder %s28, %s31
      %p37 = scmp.eq.s32.totalorder %s18, 0
      %p38 = por %p36, %p37
      %p39 = scmp.ne.s32.totalorder %s28, %s31
      %p40 = scmp.eq.s32.totalorder %s23, 1
      %p41 = por %p39, %p40
      %p42 = scmp.ne.s32.totalorder %s31, %s32
      %p43 = scmp.eq.s32.totalorder %s23, 0
      %p44 = por %p42, %p43
      %p45 = scmp.ne.s32.totalorder %s31, %s32
      %p46 = scmp.eq.s32.totalorder %s24, 1
      %p47 = por %p45, %p46
      %p49 = scmp.ne.s32.totalorder %s32, %s48
      %p50 = scmp.eq.s32.totalorder %s24, 0
      %p51 = por %p49, %p50
      %s53 = sadd.s32 %s52, 1
      %p56 = scmp.eq.s32.totalorder %s18, 1
      %p57 = scmp.ne.s32.totalorder %s52, %s54
      %p58 = scmp.eq.s32.totalorder %s18, 0
      %p59 = por %p57, %p58
      %p60 = scmp.ne.s32.totalorder %s52, %s54
      %p61 = scmp.eq.s32.totalorder %s23, 1
      %p62 = por %p60, %p61
      %p63 = scmp.ne.s32.totalorder %s54, %s55
      %p64 = scmp.eq.s32.totalorder %s23, 0
      %p65 = por %p63, %p64
      %p66 = scmp.ne.s32.totalorder %s54, %s55
      %p67 = scmp.eq.s32.totalorder %s24, 1
      %p68 = por %p66, %p67
      %p70 = scmp.ne.s32.totalorder %s55, %s69
      %p71 = scmp.eq.s32.totalorder %s24, 0
      %p72 = por %p70, %p71
      %s74 = sadd.s32 %s73, 1
      %p77 = scmp.eq.s32.totalorder %s18, 1
      %p78 = scmp.ne.s32.totalorder %s73, %s75
      %p79 = scmp.eq.s32.totalorder %s18, 0
      %p80 = por %p78, %p79
      %p81 = scmp.ne.s32.totalorder %s73, %s75
      %p82 = scmp.eq.s32.totalorder %s23, 1
      %p83 = por %p81, %p82
      %p84 = scmp.ne.s32.totalorder %s75, %s76
      %p85 = scmp.eq.s32.totalorder %s23, 0
      %p86 = por %p84, %p85
      %p87 = scmp.ne.s32.totalorder %s75, %s76
      %p88 = scmp.eq.s32.totalorder %s24, 1
      %p89 = por %p87, %p88
      %p91 = scmp.ne.s32.totalorder %s76, %s90
      %p92 = scmp.eq.s32.totalorder %s24, 0
      %p93 = por %p91, %p92
      %s95 = sadd.s32 %s94, 1
      %p98 = scmp.eq.s32.totalorder %s18, 1
      %p99 = scmp.ne.s32.totalorder %s94, %s96
      %p100 = scmp.eq.s32.totalorder %s18, 0
      %p101 = por %p99, %p100
      %p102 = scmp.ne.s32.totalorder %s94, %s96
      %p103 = scmp.eq.s32.totalorder %s23, 1
      %p104 = por %p102, %p103
      %p105 = scmp.ne.s32.totalorder %s96, %s97
      %p106 = scmp.eq.s32.totalorder %s23, 0
      %p107 = por %p105, %p106
      %p108 = scmp.ne.s32.totalorder %s96, %s97
      %p109 = scmp.eq.s32.totalorder %s24, 1
      %p110 = por %p108, %p109
      %p112 = scmp.ne.s32.totalorder %s97, %s111
      %p113 = scmp.eq.s32.totalorder %s24, 0
      %p114 = por %p112, %p113
      %s116 = sadd.s32 %s115, 1
      %p119 = scmp.eq.s32.totalorder %s18, 1
      %p120 = scmp.ne.s32.totalorder %s115, %s117
      %p121 = scmp.eq.s32.totalorder %s18, 0
      %p122 = por %p120, %p121
      %p123 = scmp.ne.s32.totalorder %s115, %s117
      %p124 = scmp.eq.s32.totalorder %s23, 1
      %p125 = por %p123, %p124
      %p126 = scmp.ne.s32.totalorder %s117, %s118
      %p127 = scmp.eq.s32.totalorder %s23, 0
      %p128 = por %p126, %p127
      %p129 = scmp.ne.s32.totalorder %s117, %s118
      %p130 = scmp.eq.s32.totalorder %s24, 1
      %p131 = por %p129, %p130
      %p133 = scmp.ne.s32.totalorder %s118, %s132
      %p134 = scmp.eq.s32.totalorder %s24, 0
      %p135 = por %p133, %p134
      %s137 = sadd.s32 %s136, 1
      %p140 = scmp.eq.s32.totalorder %s18, 1
      %p141 = scmp.ne.s32.totalorder %s136, %s138
      %p142 = scmp.eq.s32.totalorder %s18, 0
      %p143 = por %p141, %p142
      %p144 = scmp.ne.s32.totalorder %s136, %s138
      %p145 = scmp.eq.s32.totalorder %s23, 1
      %p146 = por %p144, %p145
      %p147 = scmp.ne.s32.totalorder %s138, %s139
      %p148 = scmp.eq.s32.totalorder %s23, 0
      %p149 = por %p147, %p148
      %p150 = scmp.ne.s32.totalorder %s138, %s139
      %p151 = scmp.eq.s32.totalorder %s24, 1
      %p152 = por %p150, %p151
      %p154 = scmp.ne.s32.totalorder %s139, %s153
      %p155 = scmp.eq.s32.totalorder %s24, 0
      %p156 = por %p154, %p155
      %s158 = sadd.s32 %s157, 1
      %p161 = scmp.eq.s32.totalorder %s18, 1
      %p162 = scmp.ne.s32.totalorder %s157, %s159
      %p163 = scmp.eq.s32.totalorder %s18, 0
      %p164 = por %p162, %p163
      %p165 = scmp.ne.s32.totalorder %s157, %s159
      %p166 = scmp.eq.s32.totalorder %s23, 1
      %p167 = por %p165, %p166
      %p168 = scmp.ne.s32.totalorder %s159, %s160
      %p169 = scmp.eq.s32.totalorder %s23, 0
      %p170 = por %p168, %p169
      %p171 = scmp.ne.s32.totalorder %s159, %s160
      %p172 = scmp.eq.s32.totalorder %s24, 1
      %p173 = por %p171, %p172
      %p175 = scmp.ne.s32.totalorder %s160, %s174
      %p176 = scmp.eq.s32.totalorder %s24, 0
      %p177 = por %p175, %p176
      %s178 = ssub.s32 %s18, %s25
      %p179 = scmp.eq.s32.totalorder %s178, 0
      %s181 = sadd.s32 %s180, 1
      %s182 = scalar_select %p179, %s180, %s181
      %p185 = pneg %p179
      %p186 = scmp.eq.s32.totalorder %s18, 1
      %p187 = por %p185, %p186
      %p188 = scmp.ne.s32.totalorder %s180, %s183
      %p189 = scmp.eq.s32.totalorder %s18, 0
      %p190 = por %p188, %p189
      %p191 = scmp.ne.s32.totalorder %s180, %s183
      %p192 = scmp.eq.s32.totalorder %s23, 1
      %p193 = por %p191, %p192
      %p194 = scmp.ne.s32.totalorder %s183, %s184
      %p195 = scmp.eq.s32.totalorder %s23, 0
      %p196 = por %p194, %p195
      %p197 = scmp.ne.s32.totalorder %s183, %s184
      %p198 = scmp.eq.s32.totalorder %s24, 1
      %p199 = por %p197, %p198
      %p201 = scmp.ne.s32.totalorder %s184, %s200
      %p202 = scmp.eq.s32.totalorder %s24, 0
      %p203 = por %p201, %p202
      %p204 = scmp.le.s32.totalorder 1, %s18
      %p205 = scmp.lt.s32.totalorder %s18, 3
      %p206 = pnand %p204, %p205
      %p207 = pneg %p206
      // Predicated region
      $region9: #{tpu_custom_call.1} parent=5 // pred_check
        _
      $region10: #{tpu_custom_call.1} parent=5 // pred_check_branch
        %209 = sbr.rel (%p206) target = $region12
      $region11: #{tpu_custom_call.1} parent=5 // pred_region
        %s210 = ssub.s32 %s18, 1
        // Predicated region
        $region13: #{tpu_custom_call.1} parent=11 // pred_check
          %p211 = pneg %p65
        $region14: #{tpu_custom_call.1} parent=11 // pred_check_branch
          %213 = sbr.rel (%p211) target = $region16
        $region15: #{tpu_custom_call.1} parent=11 // pred_region
          _
        $region16: #{tpu_custom_call.1} parent=11 // pred_fallthru
          _
        // Predicated region
        $region17: #{tpu_custom_call.1} parent=11 // pred_check
          %p214 = pneg %p86
        $region18: #{tpu_custom_call.1} parent=11 // pred_check_branch
          %216 = sbr.rel (%p214) target = $region20
        $region19: #{tpu_custom_call.1} parent=11 // pred_region
          _
        $region20: #{tpu_custom_call.1} parent=11 // pred_fallthru
          _
        // Predicated region
        $region21: #{tpu_custom_call.1} parent=11 // pred_check
          %p217 = pneg %p107
        $region22: #{tpu_custom_call.1} parent=11 // pred_check_branch
          %219 = sbr.rel (%p217) target = $region24
        $region23: #{tpu_custom_call.1} parent=11 // pred_region
          _
        $region24: #{tpu_custom_call.1} parent=11 // pred_fallthru
          _
        // Predicated region
        $region25: #{tpu_custom_call.1} parent=11 // pred_check
          %p220 = pneg %p128
        $region26: #{tpu_custom_call.1} parent=11 // pred_check_branch
          %222 = sbr.rel (%p220) target = $region28
        $region27: #{tpu_custom_call.1} parent=11 // pred_region
          _
        $region28: #{tpu_custom_call.1} parent=11 // pred_fallthru
          _
        // Predicated region
        $region29: #{tpu_custom_call.1} parent=11 // pred_check
          %p223 = pneg %p149
        $region30: #{tpu_custom_call.1} parent=11 // pred_check_branch
          %225 = sbr.rel (%p223) target = $region32
        $region31: #{tpu_custom_call.1} parent=11 // pred_region
          _
        $region32: #{tpu_custom_call.1} parent=11 // pred_fallthru
          _
        // Predicated region
        $region33: #{tpu_custom_call.1} parent=11 // pred_check
          %p226 = pneg %p170
        $region34: #{tpu_custom_call.1} parent=11 // pred_check_branch
          %228 = sbr.rel (%p226) target = $region36
        $region35: #{tpu_custom_call.1} parent=11 // pred_region
          _
        $region36: #{tpu_custom_call.1} parent=11 // pred_fallthru
          _
      $region12: #{tpu_custom_call.1} parent=5 // pred_fallthru
        _
      %p229 = scmp.lt.s32.totalorder %s18, 2
      // Predicated region
      $region37: #{tpu_custom_call.1} parent=5 // pred_check
        %p230 = pneg %p229
      $region38: #{tpu_custom_call.1} parent=5 // pred_check_branch
        %232 = sbr.rel (%p230) target = $region40
      $region39: #{tpu_custom_call.1} parent=5 // pred_region
        // Predicated region
        $region41: #{tpu_custom_call.1} parent=39 // pred_check
          %p233 = pneg %p38
        $region42: #{tpu_custom_call.1} parent=39 // pred_check_branch
          %235 = sbr.rel (%p233) target = $region44
        $region43: #{tpu_custom_call.1} parent=39 // pred_region
          %s236 = smul.u32 4, %s18
          %p237 = scmp.lt.s32.totalorder %s236, 7
          %s238 = scalar_select %p237, %s236, 7
          %s239 = scalar_lea.vmem %s0, %s238
          %s240 = smul.u32 4, %s18
        $region44: #{tpu_custom_call.1} parent=39 // pred_fallthru
          _
      $region40: #{tpu_custom_call.1} parent=5 // pred_fallthru
        _
      %p241 = scmp.le.s32.totalorder 1, %s18
      %p242 = scmp.lt.s32.totalorder %s18, 3
      %p243 = pnand %p241, %p242
      %p244 = pneg %p243
      // Predicated region
      $region45: #{tpu_custom_call.1} parent=5 // pred_check
        _
      $region46: #{tpu_custom_call.1} parent=5 // pred_check_branch
        %246 = sbr.rel (%p243) target = $region48
      $region47: #{tpu_custom_call.1} parent=5 // pred_region
        %s247 = ssub.s32 %s18, 1
        %s248 = smul.u32 4, %s23
        %p249 = scmp.lt.s32.totalorder %s248, 7
        %s250 = scalar_select %p249, %s248, 7
        %s251 = scalar_lea.vmem %s0, %s250
        %p252 = pneg %p44
        %p253 = pneg %p41
        %p254 = pneg %p65
        %p255 = pneg %p62
        %p256 = pneg %p86
        %p257 = pneg %p83
        %p258 = pneg %p107
        %p259 = pneg %p104
        %p260 = pneg %p128
        %p261 = pneg %p125
        %p262 = pneg %p149
        %p263 = pneg %p146
        %p264 = pneg %p170
        %p265 = pneg %p167
        %p266 = pneg %p196
        %p267 = pneg %p193
        %s268 = sand.u32 %s183, 1
        %s269 = scalar_lea.sflag [#allocation4], %s268
        %s270 = sand.u32 %s183, 1
        %s271 = smul.addr %s270, 4
        %s272 = scalar_lea.vmem [#allocation3], %s271
        %s273 = smul.u32 4, %s23
        %p274 = scmp.lt.s32.totalorder %s273, 7
        %s275 = scalar_select %p274, %s273, 7
        %s276 = scalar_lea.vmem %s0, %s275
        %s277 = smul.u32 4, %s23
        %s278 = smul.u32 4, %s23
        %v279 = vld [vmem:[%s1] sm:$0xff]
        %v280 = vld [vmem:[%s1 + $0x8] sm:$0xff]
        %v281 = vld [vmem:[%s1 + $0x10] sm:$0xff]
        %v282 = vld [vmem:[%s1 + $0x18] sm:$0xff]
        %v283 = vld [vmem:[%s276] sm:$0xf]
        %285 = vset.pattern.permute.xlu0 0
        %286 = vperm.xlu0 %285, %v279
        %v287 = vpop.permute.xlu0 %286
        %290 = vset.pattern.permute.xlu0 0
        %291 = vperm.xlu0 %290, %v280
        %v292 = vpop.permute.xlu0 %291
        %295 = vset.pattern.permute.xlu0 0
        %296 = vperm.xlu0 %295, %v281
        %v297 = vpop.permute.xlu0 %296
        %300 = vset.pattern.permute.xlu0 0
        %301 = vperm.xlu0 %300, %v282
        %v302 = vpop.permute.xlu0 %301
        %v305 = vlaneseq
        %v306 = vshrl.u32 %v305, 7
        %v307 = vsub.s32 0, %v306
        %v308 = vrot.slane %v283, %v307
        %v309 = vlaneseq
        %v310 = vshrl.u32 %v309, 7
        %v311 = vsub.s32 1, %v310
        %v312 = vrot.slane %v283, %v311
        %v313 = vlaneseq
        %v314 = vshrl.u32 %v313, 7
        %v315 = vsub.s32 2, %v314
        %v316 = vrot.slane %v283, %v315
        %v317 = vlaneseq
        %v318 = vshrl.u32 %v317, 7
        %v319 = vsub.s32 3, %v318
        %v320 = vrot.slane %v283, %v319
        %v325 = vmul.f32 %v287, %v308
        %v326 = vmul.f32 %v287, %v312
        %v327 = vmul.f32 %v287, %v316
        %v328 = vmul.f32 %v287, %v320
        %v329 = vmul.f32 %v292, %v308
        %v330 = vmul.f32 %v292, %v312
        %v331 = vmul.f32 %v292, %v316
        %v332 = vmul.f32 %v292, %v320
        %v333 = vmul.f32 %v297, %v308
        %v334 = vmul.f32 %v297, %v312
        %v335 = vmul.f32 %v297, %v316
        %v336 = vmul.f32 %v297, %v320
        %v337 = vmul.f32 %v302, %v308
        %v338 = vmul.f32 %v302, %v312
        %v339 = vmul.f32 %v302, %v316
        %v340 = vmul.f32 %v302, %v320
        %v341 = vld [vmem:[%s2] sm:$0xff]
        %v342 = vld [vmem:[%s2 + $0x8] sm:$0xff]
        %v343 = vld [vmem:[%s2 + $0x10] sm:$0xff]
        %v344 = vld [vmem:[%s2 + $0x18] sm:$0xff]
        %346 = vset.pattern.permute.xlu0 0
        %347 = vperm.xlu0 %346, %v341
        %v348 = vpop.permute.xlu0 %347
        %351 = vset.pattern.permute.xlu0 0
        %352 = vperm.xlu0 %351, %v342
        %v353 = vpop.permute.xlu0 %352
        %356 = vset.pattern.permute.xlu0 0
        %357 = vperm.xlu0 %356, %v343
        %v358 = vpop.permute.xlu0 %357
        %361 = vset.pattern.permute.xlu0 0
        %362 = vperm.xlu0 %361, %v344
        %v363 = vpop.permute.xlu0 %362
        %v365 = vadd.f32 %v325, %v348
        %v366 = vadd.f32 %v326, %v348
        %v367 = vadd.f32 %v327, %v348
        %v368 = vadd.f32 %v328, %v348
        %v369 = vadd.f32 %v329, %v353
        %v370 = vadd.f32 %v330, %v353
        %v371 = vadd.f32 %v331, %v353
        %v372 = vadd.f32 %v332, %v353
        %v373 = vadd.f32 %v333, %v358
        %v374 = vadd.f32 %v334, %v358
        %v375 = vadd.f32 %v335, %v358
        %v376 = vadd.f32 %v336, %v358
        %v377 = vadd.f32 %v337, %v363
        %v378 = vadd.f32 %v338, %v363
        %v379 = vadd.f32 %v339, %v363
        %v380 = vadd.f32 %v340, %v363
        %v381 = vtanh.pop %v365
        %v382 = vtanh.pop %v366
        %v383 = vtanh.pop %v367
        %v384 = vtanh.pop %v368
        %v385 = vtanh.pop %v369
        %v386 = vtanh.pop %v370
        %v387 = vtanh.pop %v371
        %v388 = vtanh.pop %v372
        %v389 = vtanh.pop %v373
        %v390 = vtanh.pop %v374
        %v391 = vtanh.pop %v375
        %v392 = vtanh.pop %v376
        %v393 = vtanh.pop %v377
        %v394 = vtanh.pop %v378
        %v395 = vtanh.pop %v379
        %v396 = vtanh.pop %v380
        %v397 = vld [vmem:[%s3] sm:$0xff]
        %v398 = vld [vmem:[%s3 + $0x8] sm:$0xff]
        %v399 = vld [vmem:[%s3 + $0x10] sm:$0xff]
        %v400 = vld [vmem:[%s3 + $0x18] sm:$0xff]
        %v401 = vld [vmem:[%s4] sm:$0xff]
        %v402 = vld [vmem:[%s4 + $0x8] sm:$0xff]
        %v403 = vld [vmem:[%s4 + $0x10] sm:$0xff]
        %v404 = vld [vmem:[%s4 + $0x18] sm:$0xff]
        %406 = vset.pattern.permute.xlu0 0
        %407 = vperm.xlu0 %406, %v401
        %v408 = vpop.permute.xlu0 %407
        %411 = vset.pattern.permute.xlu0 0
        %412 = vperm.xlu0 %411, %v402
        %v413 = vpop.permute.xlu0 %412
        %416 = vset.pattern.permute.xlu0 0
        %417 = vperm.xlu0 %416, %v403
        %v418 = vpop.permute.xlu0 %417
        %421 = vset.pattern.permute.xlu0 0
        %422 = vperm.xlu0 %421, %v404
        %v423 = vpop.permute.xlu0 %422
        %vm425 = vcmask 261120
        %v427 = vsel %vm425, %v397, 0
        %v430 = vsel %vm425, %v398, 0
        %v433 = vsel %vm425, %v399, 0
        %v436 = vsel %vm425, %v400, 0
        %438 = vmatprep.subr.mxu0 %v382
        %439 = vmatpush1.msra.mxu0 %v381
        %440 = vmatprep.subr.mxu0 %v386
        %441 = vmatpush1.msra.mxu0 %v385
        %442 = vmatprep.subr.mxu0 %v390
        %443 = vmatpush1.msra.mxu0 %v389
        %444 = vmatprep.subr.mxu0 %v394
        %445 = vmatpush1.msra.mxu0 %v393
        %446 = vmatprep.subr.mxu0 0.0
        %447 = vmatpush1.msra.mxu0 0.0
        %448 = vmatprep.subr.mxu0 0.0
        %449 = vmatpush1.msra.mxu0 0.0
        %450 = vmatprep.subr.mxu0 0.0
        %451 = vmatpush1.msra.mxu0 0.0
        %452 = vmatprep.subr.mxu0 0.0
        %453 = vmatpush1.msra.mxu0 0.0
        %454 = vmatprep.subr.mxu0 0.0
        %455 = vmatpush1.msra.mxu0 0.0
        %456 = vmatprep.subr.mxu0 0.0
        %457 = vmatpush1.msra.mxu0 0.0
        %458 = vmatprep.subr.mxu0 0.0
        %459 = vmatpush1.msra.mxu0 0.0
        %460 = vmatprep.subr.mxu0 0.0
        %461 = vmatpush1.msra.mxu0 0.0
        %462 = vmatprep.subr.mxu0 0.0
        %463 = vmatpush1.msra.mxu0 0.0
        %464 = vmatprep.subr.mxu0 0.0
        %465 = vmatpush1.msra.mxu0 0.0
        %466 = vmatprep.subr.mxu0 0.0
        %467 = vmatpush1.msra.mxu0 0.0
        %468 = vmatprep.subr.mxu0 0.0
        %469 = vmatpush1.msra.mxu0 0.0
        %470 = vmatprep.subr.mxu0 0.0
        %471 = vmatpush1.msra.mxu0 0.0
        %472 = vmatprep.subr.mxu0 0.0
        %473 = vmatpush1.msra.mxu0 0.0
        %474 = vmatprep.subr.mxu0 0.0
        %475 = vmatpush1.msra.mxu0 0.0
        %476 = vmatprep.subr.mxu0 0.0
        %477 = vmatpush1.msra.mxu0 0.0
        %478 = vmatprep.subr.mxu0 0.0
        %479 = vmatpush1.msra.mxu0 0.0
        %480 = vmatprep.subr.mxu0 0.0
        %481 = vmatpush1.msra.mxu0 0.0
        %482 = vmatprep.subr.mxu0 0.0
        %483 = vmatpush1.msra.mxu0 0.0
        %484 = vmatprep.subr.mxu0 0.0
        %485 = vmatpush1.msra.mxu0 0.0
        %486 = vmatprep.subr.mxu0 0.0
        %487 = vmatpush1.msra.mxu0 0.0
        %488 = vmatprep.subr.mxu0 0.0
        %489 = vmatpush1.msra.mxu0 0.0
        %490 = vmatprep.subr.mxu0 0.0
        %491 = vmatpush1.msra.mxu0 0.0
        %492 = vmatprep.subr.mxu0 0.0
        %493 = vmatpush1.msra.mxu0 0.0
        %494 = vmatprep.subr.mxu0 0.0
        %495 = vmatpush1.msra.mxu0 0.0
        %496 = vmatprep.subr.mxu0 0.0
        %497 = vmatpush1.msra.mxu0 0.0
        %498 = vmatprep.subr.mxu0 0.0
        %499 = vmatpush1.msra.mxu0 0.0
        %500 = vmatprep.subr.mxu0 0.0
        %501 = vmatpush1.msra.mxu0 0.0
        %502 = vmatprep.mubr.f32.mxu0 0.0
        %503 = vmatmul.mubr.f32.gmra.mrb[0].mxu0 %v427
        %v504 = vpop.f32.mrb[0].mxu0
        %v505 = vadd.f32 %v408, %v504
        %v506 = vpop.f32.mrb[0].mxu0
        %v507 = vadd.f32 %v408, %v506
        %508 = vmatprep.mubr.f32.mxu0 0.0
        %509 = vmatmul.mubr.f32.gmra.mrb[0].mxu0 %v430
        %v510 = vpop.f32.mrb[0].mxu0
        %v511 = vadd.f32 %v413, %v510
        %v512 = vpop.f32.mrb[0].mxu0
        %v513 = vadd.f32 %v413, %v512
        %514 = vmatprep.mubr.f32.mxu0 0.0
        %515 = vmatmul.mubr.f32.gmra.mrb[0].mxu0 %v433
        %v516 = vpop.f32.mrb[0].mxu0
        %v517 = vadd.f32 %v418, %v516
        %v518 = vpop.f32.mrb[0].mxu0
        %v519 = vadd.f32 %v418, %v518
        %520 = vmatprep.mubr.f32.mxu0 0.0
        %521 = vmatmul.mubr.f32.gmra.mrb[0].mxu0 %v436
        %v522 = vpop.f32.mrb[0].mxu0
        %v523 = vadd.f32 %v423, %v522
        %v524 = vpop.f32.mrb[0].mxu0
        %v525 = vadd.f32 %v423, %v524
        %526 = vdwg.mxu0
        %527 = vmatprep.subr.mxu0 %v384
        %528 = vmatpush1.msra.mxu0 %v383
        %529 = vmatprep.subr.mxu0 %v388
        %530 = vmatpush1.msra.mxu0 %v387
        %531 = vmatprep.subr.mxu0 %v392
        %532 = vmatpush1.msra.mxu0 %v391
        %533 = vmatprep.subr.mxu0 %v396
        %534 = vmatpush1.msra.mxu0 %v395
        %535 = vmatprep.subr.mxu0 0.0
        %536 = vmatpush1.msra.mxu0 0.0
        %537 = vmatprep.subr.mxu0 0.0
        %538 = vmatpush1.msra.mxu0 0.0
        %539 = vmatprep.subr.mxu0 0.0
        %540 = vmatpush1.msra.mxu0 0.0
        %541 = vmatprep.subr.mxu0 0.0
        %542 = vmatpush1.msra.mxu0 0.0
        %543 = vmatprep.subr.mxu0 0.0
        %544 = vmatpush1.msra.mxu0 0.0
        %545 = vmatprep.subr.mxu0 0.0
        %546 = vmatpush1.msra.mxu0 0.0
        %547 = vmatprep.subr.mxu0 0.0
        %548 = vmatpush1.msra.mxu0 0.0
        %549 = vmatprep.subr.mxu0 0.0
        %550 = vmatpush1.msra.mxu0 0.0
        %551 = vmatprep.subr.mxu0 0.0
        %552 = vmatpush1.msra.mxu0 0.0
        %553 = vmatprep.subr.mxu0 0.0
        %554 = vmatpush1.msra.mxu0 0.0
        %555 = vmatprep.subr.mxu0 0.0
        %556 = vmatpush1.msra.mxu0 0.0
        %557 = vmatprep.subr.mxu0 0.0
        %558 = vmatpush1.msra.mxu0 0.0
        %559 = vmatprep.subr.mxu0 0.0
        %560 = vmatpush1.msra.mxu0 0.0
        %561 = vmatprep.subr.mxu0 0.0
        %562 = vmatpush1.msra.mxu0 0.0
        %563 = vmatprep.subr.mxu0 0.0
        %564 = vmatpush1.msra.mxu0 0.0
        %565 = vmatprep.subr.mxu0 0.0
        %566 = vmatpush1.msra.mxu0 0.0
        %567 = vmatprep.subr.mxu0 0.0
        %568 = vmatpush1.msra.mxu0 0.0
        %569 = vmatprep.subr.mxu0 0.0
        %570 = vmatpush1.msra.mxu0 0.0
        %571 = vmatprep.subr.mxu0 0.0
        %572 = vmatpush1.msra.mxu0 0.0
        %573 = vmatprep.subr.mxu0 0.0
        %574 = vmatpush1.msra.mxu0 0.0
        %575 = vmatprep.subr.mxu0 0.0
        %576 = vmatpush1.msra.mxu0 0.0
        %577 = vmatprep.subr.mxu0 0.0
        %578 = vmatpush1.msra.mxu0 0.0
        %579 = vmatprep.subr.mxu0 0.0
        %580 = vmatpush1.msra.mxu0 0.0
        %581 = vmatprep.subr.mxu0 0.0
        %582 = vmatpush1.msra.mxu0 0.0
        %583 = vmatprep.subr.mxu0 0.0
        %584 = vmatpush1.msra.mxu0 0.0
        %585 = vmatprep.subr.mxu0 0.0
        %586 = vmatpush1.msra.mxu0 0.0
        %587 = vmatprep.subr.mxu0 0.0
        %588 = vmatpush1.msra.mxu0 0.0
        %589 = vmatprep.subr.mxu0 0.0
        %590 = vmatpush1.msra.mxu0 0.0
        %591 = vmatprep.mubr.f32.mxu0 0.0
        %592 = vmatmul.mubr.f32.gmra.mrb[0].mxu0 %v427
        %v593 = vpop.f32.mrb[0].mxu0
        %v594 = vadd.f32 %v408, %v593
        %v595 = vpop.f32.mrb[0].mxu0
        %v596 = vadd.f32 %v408, %v595
        %597 = vmatprep.mubr.f32.mxu0 0.0
        %598 = vmatmul.mubr.f32.gmra.mrb[0].mxu0 %v430
        %v599 = vpop.f32.mrb[0].mxu0
        %v600 = vadd.f32 %v413, %v599
        %v601 = vpop.f32.mrb[0].mxu0
        %v602 = vadd.f32 %v413, %v601
        %603 = vmatprep.mubr.f32.mxu0 0.0
        %604 = vmatmul.mubr.f32.gmra.mrb[0].mxu0 %v433
        %v605 = vpop.f32.mrb[0].mxu0
        %v606 = vadd.f32 %v418, %v605
        %v607 = vpop.f32.mrb[0].mxu0
        %v608 = vadd.f32 %v418, %v607
        %609 = vmatprep.mubr.f32.mxu0 0.0
        %610 = vmatmul.mubr.f32.gmra.mrb[0].mxu0 %v436
        %v611 = vpop.f32.mrb[0].mxu0
        %v612 = vadd.f32 %v423, %v611
        %v613 = vpop.f32.mrb[0].mxu0
        %v614 = vadd.f32 %v423, %v613
        %615 = vdwg.mxu0
        %v616 = vtanh.pop %v505
        %v617 = vtanh.pop %v507
        %v618 = vtanh.pop %v594
        %v619 = vtanh.pop %v596
        %v620 = vtanh.pop %v511
        %v621 = vtanh.pop %v513
        %v622 = vtanh.pop %v600
        %v623 = vtanh.pop %v602
        %v624 = vtanh.pop %v517
        %v625 = vtanh.pop %v519
        %v626 = vtanh.pop %v606
        %v627 = vtanh.pop %v608
        %v628 = vtanh.pop %v523
        %v629 = vtanh.pop %v525
        %v630 = vtanh.pop %v612
        %v631 = vtanh.pop %v614
        %s632 = scalar_lea.vmem %s3, 32
        %v633 = vld [vmem:[%s632] sm:$0xff]
        %v634 = vld [vmem:[%s632 + $0x8] sm:$0xff]
        %v635 = vld [vmem:[%s632 + $0x10] sm:$0xff]
        %v636 = vld [vmem:[%s632 + $0x18] sm:$0xff]
        %s637 = scalar_lea.vmem %s4, 32
        %v638 = vld [vmem:[%s637] sm:$0xff]
        %v639 = vld [vmem:[%s637 + $0x8] sm:$0xff]
        %v640 = vld [vmem:[%s637 + $0x10] sm:$0xff]
        %v641 = vld [vmem:[%s637 + $0x18] sm:$0xff]
        %643 = vset.pattern.permute.xlu0 0
        %644 = vperm.xlu0 %643, %v638
        %v645 = vpop.permute.xlu0 %644
        %648 = vset.pattern.permute.xlu0 0
        %649 = vperm.xlu0 %648, %v639
        %v650 = vpop.permute.xlu0 %649
        %653 = vset.pattern.permute.xlu0 0
        %654 = vperm.xlu0 %653, %v640
        %v655 = vpop.permute.xlu0 %654
        %658 = vset.pattern.permute.xlu0 0
        %659 = vperm.xlu0 %658, %v641
        %v660 = vpop.permute.xlu0 %659
        %v663 = vsel %vm425, %v633, 0
        %v666 = vsel %vm425, %v634, 0
        %v669 = vsel %vm425, %v635, 0
        %v672 = vsel %vm425, %v636, 0
        %674 = vmatprep.subr.mxu0 %v617
        %675 = vmatpush1.msra.mxu0 %v616
        %676 = vmatprep.subr.mxu0 %v621
        %677 = vmatpush1.msra.mxu0 %v620
        %678 = vmatprep.subr.mxu0 %v625
        %679 = vmatpush1.msra.mxu0 %v624
        %680 = vmatprep.subr.mxu0 %v629
        %681 = vmatpush1.msra.mxu0 %v628
        %682 = vmatprep.subr.mxu0 0.0
        %683 = vmatpush1.msra.mxu0 0.0
        %684 = vmatprep.subr.mxu0 0.0
        %685 = vmatpush1.msra.mxu0 0.0
        %686 = vmatprep.subr.mxu0 0.0
        %687 = vmatpush1.msra.mxu0 0.0
        %688 = vmatprep.subr.mxu0 0.0
        %689 = vmatpush1.msra.mxu0 0.0
        %690 = vmatprep.subr.mxu0 0.0
        %691 = vmatpush1.msra.mxu0 0.0
        %692 = vmatprep.subr.mxu0 0.0
        %693 = vmatpush1.msra.mxu0 0.0
        %694 = vmatprep.subr.mxu0 0.0
        %695 = vmatpush1.msra.mxu0 0.0
        %696 = vmatprep.subr.mxu0 0.0
        %697 = vmatpush1.msra.mxu0 0.0
        %698 = vmatprep.subr.mxu0 0.0
        %699 = vmatpush1.msra.mxu0 0.0
        %700 = vmatprep.subr.mxu0 0.0
        %701 = vmatpush1.msra.mxu0 0.0
        %702 = vmatprep.subr.mxu0 0.0
        %703 = vmatpush1.msra.mxu0 0.0
        %704 = vmatprep.subr.mxu0 0.0
        %705 = vmatpush1.msra.mxu0 0.0
        %706 = vmatprep.subr.mxu0 0.0
        %707 = vmatpush1.msra.mxu0 0.0
        %708 = vmatprep.subr.mxu0 0.0
        %709 = vmatpush1.msra.mxu0 0.0
        %710 = vmatprep.subr.mxu0 0.0
        %711 = vmatpush1.msra.mxu0 0.0
        %712 = vmatprep.subr.mxu0 0.0
        %713 = vmatpush1.msra.mxu0 0.0
        %714 = vmatprep.subr.mxu0 0.0
        %715 = vmatpush1.msra.mxu0 0.0
        %716 = vmatprep.subr.mxu0 0.0
        %717 = vmatpush1.msra.mxu0 0.0
        %718 = vmatprep.subr.mxu0 0.0
        %719 = vmatpush1.msra.mxu0 0.0
        %720 = vmatprep.subr.mxu0 0.0
        %721 = vmatpush1.msra.mxu0 0.0
        %722 = vmatprep.subr.mxu0 0.0
        %723 = vmatpush1.msra.mxu0 0.0
        %724 = vmatprep.subr.mxu0 0.0
        %725 = vmatpush1.msra.mxu0 0.0
        %726 = vmatprep.subr.mxu0 0.0
        %727 = vmatpush1.msra.mxu0 0.0
        %728 = vmatprep.subr.mxu0 0.0
        %729 = vmatpush1.msra.mxu0 0.0
        %730 = vmatprep.subr.mxu0 0.0
        %731 = vmatpush1.msra.mxu0 0.0
        %732 = vmatprep.subr.mxu0 0.0
        %733 = vmatpush1.msra.mxu0 0.0
        %734 = vmatprep.subr.mxu0 0.0
        %735 = vmatpush1.msra.mxu0 0.0
        %736 = vmatprep.subr.mxu0 0.0
        %737 = vmatpush1.msra.mxu0 0.0
        %738 = vmatprep.mubr.f32.mxu0 0.0
        %739 = vmatmul.mubr.f32.gmra.mrb[0].mxu0 %v663
        %v740 = vpop.f32.mrb[0].mxu0
        %v741 = vadd.f32 %v645, %v740
        %v742 = vpop.f32.mrb[0].mxu0
        %v743 = vadd.f32 %v645, %v742
        %744 = vmatprep.mubr.f32.mxu0 0.0
        %745 = vmatmul.mubr.f32.gmra.mrb[0].mxu0 %v666
        %v746 = vpop.f32.mrb[0].mxu0
        %v747 = vadd.f32 %v650, %v746
        %v748 = vpop.f32.mrb[0].mxu0
        %v749 = vadd.f32 %v650, %v748
        %750 = vmatprep.mubr.f32.mxu0 0.0
        %751 = vmatmul.mubr.f32.gmra.mrb[0].mxu0 %v669
        %v752 = vpop.f32.mrb[0].mxu0
        %v753 = vadd.f32 %v655, %v752
        %v754 = vpop.f32.mrb[0].mxu0
        %v755 = vadd.f32 %v655, %v754
        %756 = vmatprep.mubr.f32.mxu0 0.0
        %757 = vmatmul.mubr.f32.gmra.mrb[0].mxu0 %v672
        %v758 = vpop.f32.mrb[0].mxu0
        %v759 = vadd.f32 %v660, %v758
        %v760 = vpop.f32.mrb[0].mxu0
        %v761 = vadd.f32 %v660, %v760
        %762 = vdwg.mxu0
        %763 = vmatprep.subr.mxu0 %v619
        %764 = vmatpush1.msra.mxu0 %v618
        %765 = vmatprep.subr.mxu0 %v623
        %766 = vmatpush1.msra.mxu0 %v622
        %767 = vmatprep.subr.mxu0 %v627
        %768 = vmatpush1.msra.mxu0 %v626
        %769 = vmatprep.subr.mxu0 %v631
        %770 = vmatpush1.msra.mxu0 %v630
        %771 = vmatprep.subr.mxu0 0.0
        %772 = vmatpush1.msra.mxu0 0.0
        %773 = vmatprep.subr.mxu0 0.0
        %774 = vmatpush1.msra.mxu0 0.0
        %775 = vmatprep.subr.mxu0 0.0
        %776 = vmatpush1.msra.mxu0 0.0
        %777 = vmatprep.subr.mxu0 0.0
        %778 = vmatpush1.msra.mxu0 0.0
        %779 = vmatprep.subr.mxu0 0.0
        %780 = vmatpush1.msra.mxu0 0.0
        %781 = vmatprep.subr.mxu0 0.0
        %782 = vmatpush1.msra.mxu0 0.0
        %783 = vmatprep.subr.mxu0 0.0
        %784 = vmatpush1.msra.mxu0 0.0
        %785 = vmatprep.subr.mxu0 0.0
        %786 = vmatpush1.msra.mxu0 0.0
        %787 = vmatprep.subr.mxu0 0.0
        %788 = vmatpush1.msra.mxu0 0.0
        %789 = vmatprep.subr.mxu0 0.0
        %790 = vmatpush1.msra.mxu0 0.0
        %791 = vmatprep.subr.mxu0 0.0
        %792 = vmatpush1.msra.mxu0 0.0
        %793 = vmatprep.subr.mxu0 0.0
        %794 = vmatpush1.msra.mxu0 0.0
        %795 = vmatprep.subr.mxu0 0.0
        %796 = vmatpush1.msra.mxu0 0.0
        %797 = vmatprep.subr.mxu0 0.0
        %798 = vmatpush1.msra.mxu0 0.0
        %799 = vmatprep.subr.mxu0 0.0
        %800 = vmatpush1.msra.mxu0 0.0
        %801 = vmatprep.subr.mxu0 0.0
        %802 = vmatpush1.msra.mxu0 0.0
        %803 = vmatprep.subr.mxu0 0.0
        %804 = vmatpush1.msra.mxu0 0.0
        %805 = vmatprep.subr.mxu0 0.0
        %806 = vmatpush1.msra.mxu0 0.0
        %807 = vmatprep.subr.mxu0 0.0
        %808 = vmatpush1.msra.mxu0 0.0
        %809 = vmatprep.subr.mxu0 0.0
        %810 = vmatpush1.msra.mxu0 0.0
        %811 = vmatprep.subr.mxu0 0.0
        %812 = vmatpush1.msra.mxu0 0.0
        %813 = vmatprep.subr.mxu0 0.0
        %814 = vmatpush1.msra.mxu0 0.0
        %815 = vmatprep.subr.mxu0 0.0
        %816 = vmatpush1.msra.mxu0 0.0
        %817 = vmatprep.subr.mxu0 0.0
        %818 = vmatpush1.msra.mxu0 0.0
        %819 = vmatprep.subr.mxu0 0.0
        %820 = vmatpush1.msra.mxu0 0.0
        %821 = vmatprep.subr.mxu0 0.0
        %822 = vmatpush1.msra.mxu0 0.0
        %823 = vmatprep.subr.mxu0 0.0
        %824 = vmatpush1.msra.mxu0 0.0
        %825 = vmatprep.subr.mxu0 0.0
        %826 = vmatpush1.msra.mxu0 0.0
        %827 = vmatprep.mubr.f32.mxu0 0.0
        %828 = vmatmul.mubr.f32.gmra.mrb[0].mxu0 %v663
        %v829 = vpop.f32.mrb[0].mxu0
        %v830 = vadd.f32 %v645, %v829
        %v831 = vpop.f32.mrb[0].mxu0
        %v832 = vadd.f32 %v645, %v831
        %833 = vmatprep.mubr.f32.mxu0 0.0
        %834 = vmatmul.mubr.f32.gmra.mrb[0].mxu0 %v666
        %v835 = vpop.f32.mrb[0].mxu0
        %v836 = vadd.f32 %v650, %v835
        %v837 = vpop.f32.mrb[0].mxu0
        %v838 = vadd.f32 %v650, %v837
        %839 = vmatprep.mubr.f32.mxu0 0.0
        %840 = vmatmul.mubr.f32.gmra.mrb[0].mxu0 %v669
        %v841 = vpop.f32.mrb[0].mxu0
        %v842 = vadd.f32 %v655, %v841
        %v843 = vpop.f32.mrb[0].mxu0
        %v844 = vadd.f32 %v655, %v843
        %845 = vmatprep.mubr.f32.mxu0 0.0
        %846 = vmatmul.mubr.f32.gmra.mrb[0].mxu0 %v672
        %v847 = vpop.f32.mrb[0].mxu0
        %v848 = vadd.f32 %v660, %v847
        %v849 = vpop.f32.mrb[0].mxu0
        %v850 = vadd.f32 %v660, %v849
        %851 = vdwg.mxu0
        %v852 = vtanh.pop %v741
        %v853 = vtanh.pop %v743
        %v854 = vtanh.pop %v830
        %v855 = vtanh.pop %v832
        %v856 = vtanh.pop %v747
        %v857 = vtanh.pop %v749
        %v858 = vtanh.pop %v836
        %v859 = vtanh.pop %v838
        %v860 = vtanh.pop %v753
        %v861 = vtanh.pop %v755
        %v862 = vtanh.pop %v842
        %v863 = vtanh.pop %v844
        %v864 = vtanh.pop %v759
        %v865 = vtanh.pop %v761
        %v866 = vtanh.pop %v848
        %v867 = vtanh.pop %v850
        %v868 = vld [vmem:[%s5] sm:$0xff]
        %v869 = vld [vmem:[%s5 + $0x8] sm:$0xff]
        %v870 = vld [vmem:[%s5 + $0x10] sm:$0xff]
        %v871 = vld [vmem:[%s5 + $0x18] sm:$0xff]
        %873 = vset.pattern.permute.xlu0 0
        %874 = vperm.xlu0 %873, %v868
        %v875 = vpop.permute.xlu0 %874
        %878 = vset.pattern.permute.xlu0 0
        %879 = vperm.xlu0 %878, %v869
        %v880 = vpop.permute.xlu0 %879
        %883 = vset.pattern.permute.xlu0 0
        %884 = vperm.xlu0 %883, %v870
        %v885 = vpop.permute.xlu0 %884
        %888 = vset.pattern.permute.xlu0 0
        %889 = vperm.xlu0 %888, %v871
        %v890 = vpop.permute.xlu0 %889
        %v892 = vmul.f32 %v852, %v875
        %v893 = vmul.f32 %v853, %v875
        %v894 = vmul.f32 %v854, %v875
        %v895 = vmul.f32 %v855, %v875
        %v896 = vmul.f32 %v856, %v880
        %v897 = vmul.f32 %v857, %v880
        %v898 = vmul.f32 %v858, %v880
        %v899 = vmul.f32 %v859, %v880
        %v900 = vmul.f32 %v860, %v885
        %v901 = vmul.f32 %v861, %v885
        %v902 = vmul.f32 %v862, %v885
        %v903 = vmul.f32 %v863, %v885
        %v904 = vmul.f32 %v864, %v890
        %v905 = vmul.f32 %v865, %v890
        %v906 = vmul.f32 %v866, %v890
        %v907 = vmul.f32 %v867, %v890
        %v908 = vadd.f32 %v892, %v896
        %v909 = vadd.f32 %v908, %v900
        %v910 = vadd.f32 %v909, %v904
        %v911 = vrot.slane %v910, 4
        %v912 = vadd.f32 %v910, %v911
        %v913 = vrot.slane %v912, 2
        %v914 = vadd.f32 %v912, %v913
        %v915 = vrot.slane %v914, 1
        %v916 = vadd.f32 %v914, %v915
        %v917 = vadd.f32 %v893, %v897
        %v918 = vadd.f32 %v917, %v901
        %v919 = vadd.f32 %v918, %v905
        %v920 = vrot.slane %v919, 4
        %v921 = vadd.f32 %v919, %v920
        %v922 = vrot.slane %v921, 2
        %v923 = vadd.f32 %v921, %v922
        %v924 = vrot.slane %v923, 1
        %v925 = vadd.f32 %v923, %v924
        %v926 = vadd.f32 %v894, %v898
        %v927 = vadd.f32 %v926, %v902
        %v928 = vadd.f32 %v927, %v906
        %v929 = vrot.slane %v928, 4
        %v930 = vadd.f32 %v928, %v929
        %v931 = vrot.slane %v930, 2
        %v932 = vadd.f32 %v930, %v931
        %v933 = vrot.slane %v932, 1
        %v934 = vadd.f32 %v932, %v933
        %v935 = vadd.f32 %v895, %v899
        %v936 = vadd.f32 %v935, %v903
        %v937 = vadd.f32 %v936, %v907
        %v938 = vrot.slane %v937, 4
        %v939 = vadd.f32 %v937, %v938
        %v940 = vrot.slane %v939, 2
        %v941 = vadd.f32 %v939, %v940
        %v942 = vrot.slane %v941, 1
        %v943 = vadd.f32 %v941, %v942
        %v944 = vld [vmem:[#allocation2] sm:$0x1]
        %946 = vset.pattern.permute.xlu0 0
        %947 = vperm.xlu0 %946, %v944
        %v948 = vpop.permute.xlu0 %947
        %v950 = vlaneseq
        %v951 = vshrl.u32 %v950, 7
        %v952 = vsub.s32 0, %v951
        %v953 = vrot.slane %v948, %v952
        %v954 = vadd.f32 %v916, %v953
        %v955 = vadd.f32 %v925, %v953
        %v956 = vadd.f32 %v934, %v953
        %v957 = vadd.f32 %v943, %v953
        %v962 = vcombine.low %v954, %v955
        %v963 = vcombine.low %v956, %v957
        %v965 = vunpack.c.l.s4 1966171168
        %v966 = vunpack.c.0.s8 %v965
        %v967 = vlaneseq
        %v968 = vshrl.u32 %v967, 7
        %v969 = vsub.s32 %v966, %v968
        %v970 = vrot.slane %v962, %v969
        %v972 = vunpack.c.l.s4 1966171168
        %v973 = vunpack.c.0.s8 %v972
        %v974 = vlaneseq
        %v975 = vshrl.u32 %v974, 7
        %v976 = vsub.s32 %v973, %v975
        %v977 = vrot.slane %v963, %v976
        %v978 = vcombine.low %v970, %v977
        %v980 = vunpack.c.l.s4 1966171168
        %v981 = vunpack.c.0.s8 %v980
        %v982 = vlaneseq
        %v983 = vshrl.u32 %v982, 7
        %v984 = vsub.s32 %v981, %v983
        %v985 = vrot.slane %v978, %v984
        %v987 = vlaneseq
        %vm988 = vcmp.ge.s32.totalorder %v987, 0
        %vm989 = vcmp.lt.s32.totalorder %v987, 512
        %vm990 = vmand %vm988, %vm989
        %991 = vst.msk [vmem:[%s272] sm:$0xf] %vm990, %v985
        %s992 = sand.u32 %s183, 1
        %s993 = scalar_lea.sflag [#allocation4], %s992
        %s994 = sand.u32 %s183, 1
        %s995 = smul.addr %s994, 4
        %s996 = scalar_lea.vmem [#allocation3], %s995
        // Predicated region
        $region49: #{tpu_custom_call.1} parent=47 // pred_check
          %p997 = pneg %p193
        $region50: #{tpu_custom_call.1} parent=47 // pred_check_branch
          %999 = sbr.rel (%p997) target = $region52
        $region51: #{tpu_custom_call.1} parent=47 // pred_region
          %s1000 = smul.u32 4, %s23
          %s1002 = ssub.s32 64, 64
          %1003 = vsyncadd %s993, %s1002
          %s1004 = smul.addr %s1000, 16
          %s1005 = scalar_lea.hbm %s7, %s1004
          %s1007 = sshll.u32 %s996, 4
          %s1008 = int_to_ptr.vmem [resolvable:$true] %s1007
          %1010 = dma.vmem_to_hbm [thread:$0]  %s1008, 64, %s1005, %s993
        $region52: #{tpu_custom_call.1} parent=47 // pred_fallthru
          _
      $region48: #{tpu_custom_call.1} parent=5 // pred_fallthru
        _
      %p1011 = scmp.le.s32.totalorder 2, %s18
      // Predicated region
      $region53: #{tpu_custom_call.1} parent=5 // pred_check
        %p1012 = pneg %p1011
      $region54: #{tpu_custom_call.1} parent=5 // pred_check_branch
        %1014 = sbr.rel (%p1012) target = $region56
      $region55: #{tpu_custom_call.1} parent=5 // pred_region
        %s1015 = ssub.s32 %s18, 2
        // Predicated region
        $region57: #{tpu_custom_call.1} parent=55 // pred_check
          %p1016 = pneg %p199
        $region58: #{tpu_custom_call.1} parent=55 // pred_check_branch
          %1018 = sbr.rel (%p1016) target = $region60
        $region59: #{tpu_custom_call.1} parent=55 // pred_region
          %s1019 = sand.u32 %s184, 1
          %s1020 = scalar_lea.sflag [#allocation4], %s1019
          %s1021 = sand.u32 %s184, 1
          %s1022 = smul.addr %s1021, 4
          %s1023 = scalar_lea.vmem [#allocation3], %s1022
          %1024 = dma.done %s1020, 64
        $region60: #{tpu_custom_call.1} parent=55 // pred_fallthru
          _
      $region56: #{tpu_custom_call.1} parent=5 // pred_fallthru
        _
    $region6: #{tpu_custom_call.1} parent=1 // loop_footer
      %s22 = sadd.s32 1, %s18
    $region7: #{tpu_custom_call.1} parent=1 // loop_footer_branch
      %17 = sbr.rel target = $region3
    $region8: #{tpu_custom_call.1} parent=1 // loop_exit
      _
    %1025 = vsyncpa [#allocation4], 1
    %s1026 = scalar_lea.sflag [#allocation4], 1
    %1027 = vsyncpa %s1026, 1

</llo_original>
